<compile_context>
chip_gen: v5e
topology: v5e:2x2
jax: 0.10.0
libtpu: 0.0.40
codegen_flags: <defaults>
</compile_context>

<pallas_src>
import functools
import math

import jax
import jax.numpy as jnp
import numpy as np
from jax.experimental import pallas as pl
from jax.experimental.pallas import tpu as pltpu


def encoder_layer_kernel(x_ref, bias_ref, wqkv_ref, bqkv_ref, wo_ref, bo_ref,
                         w1_ref, b1_ref, w2_ref, b2_ref,
                         out_ref, y_ref, acc_ref, *, num_heads):
    kff = pl.program_id(1)
    last_ff = pl.num_programs(1) - 1
    H = num_heads

    def layer_norm(z):
        # F.layer_norm without affine params: biased variance, eps = 1e-5.
        # Two-pass (centered) variance: robust against cancellation.
        mu = jnp.mean(z, axis=-1, keepdims=True)
        zc = z - mu
        var = jnp.mean(zc * zc, axis=-1, keepdims=True)
        return zc * jax.lax.rsqrt(var + 1e-5)

    # ---- attention + first residual/LayerNorm: once per batch element ----
    @pl.when(kff == 0)
    def _attention_and_first_ln():
        x = x_ref[0]                              # (S, D) f32
        S, D = x.shape
        dh = D // H

        # Fused lane-dense QKV projection (1/sqrt(dh) already folded into
        # Wq / bq by the wrapper).  bf16 MXU inputs, f32 accumulation.
        qkv = jnp.dot(x.astype(jnp.bfloat16), wqkv_ref[...],
                      preferred_element_type=jnp.float32) + bqkv_ref[...]
        q, k, v = qkv[:, :D], qkv[:, D:2 * D], qkv[:, 2 * D:]

        def split_heads(z):                       # (S, D) -> (H, S, dh)
            return jnp.stack(
                [z[:, h * dh:(h + 1) * dh] for h in range(H)], axis=0)

        qh = split_heads(q).astype(jnp.bfloat16)
        kh = split_heads(k).astype(jnp.bfloat16)
        vh = split_heads(v).astype(jnp.bfloat16)

        bias = bias_ref[0].astype(jnp.float32)    # (S, S) additive mask bias
        logits = jnp.einsum('hqd,hkd->hqk', qh, kh,
                            preferred_element_type=jnp.float32) + bias
        m = jnp.max(logits, axis=-1, keepdims=True)
        e = jnp.exp(logits - m)
        denom = jnp.sum(e, axis=-1, keepdims=True)
        probs = (e * pl.reciprocal(denom, approx=True)).astype(jnp.bfloat16)
        ctx = jnp.einsum('hqk,hkd->hqd', probs, vh,
                         preferred_element_type=jnp.float32)        # (H,S,dh)

        # Merge heads, then one (S,D)x(D,D) output projection (K = D fills the
        # MXU systolic depth instead of per-head K = dh).
        ctx_m = jnp.concatenate([ctx[h] for h in range(H)],
                                axis=-1).astype(jnp.bfloat16)       # (S, D)
        attn = jnp.dot(ctx_m, wo_ref[...],
                       preferred_element_type=jnp.float32) + bo_ref[...]

        # TODO(synk): F.dropout is stochastic; dropout prob is 0.0 -> identity.
        y_ref[...] = layer_norm(x + attn)
        acc_ref[...] = jnp.zeros_like(acc_ref)

    # ---- Feed-forward, tiled over d_ff (grid axis 1, 'arbitrary') ----
    y_bf = y_ref[...].astype(jnp.bfloat16)
    h1 = jnp.maximum(
        jnp.dot(y_bf, w1_ref[...], preferred_element_type=jnp.float32)
        + b1_ref[...], 0.0)
    acc_ref[...] += jnp.dot(h1.astype(jnp.bfloat16), w2_ref[...],
                            preferred_element_type=jnp.float32)

    @pl.when(kff == last_ff)
    def _final_ln_and_store():
        o = acc_ref[...] + b2_ref[...]
        # TODO(synk): second F.dropout also identity (p=0.0).
        out_ref[0] = layer_norm(y_ref[...] + o)


def _ff_tile(d_ff, target=512):
    """Largest d_ff tile <= target that is a multiple of 128 and divides d_ff."""
    if d_ff <= target:
        return d_ff
    t = target
    while t >= 128:
        if d_ff % t == 0:
            return t
        t -= 128
    return d_ff


def encoder_layer(x, mask, params, num_heads):
    B, S, D = x.shape
    H = num_heads
    assert D % H == 0
    dh = D // H
    d_ff = params['w1'].shape[0]

    # ---- one-time weight preparation (plain XLA, outside the kernel) ----
    # PyTorch nn.Linear stores (out, in); pre-transpose to (in, out), fuse
    # Q/K/V along the output dim, fold the 1/sqrt(dh) scale into Wq/bq, and
    # cast matmul weights to bf16 (biases stay f32, added post-matmul).
    scale = jnp.float32(1.0 / math.sqrt(dh))
    wqkv = jnp.concatenate(
        [params['wq'].T * scale, params['wk'].T, params['wv'].T],
        axis=1).astype(jnp.bfloat16)                               # (D, 3D)
    bqkv = jnp.concatenate(
        [params['bq'] * scale, params['bk'], params['bv']],
        axis=-1).astype(jnp.float32)                               # (1, 3D)
    wo = params['wo'].T.astype(jnp.bfloat16)                       # (D, D)
    bo = params['bo'].astype(jnp.float32)                          # (1, D)
    w1 = params['w1'].T.astype(jnp.bfloat16)                       # (D, d_ff)
    b1 = params['b1'].astype(jnp.float32)                          # (1, d_ff)
    w2 = params['w2'].T.astype(jnp.bfloat16)                       # (d_ff, D)
    b2 = params['b2'].astype(jnp.float32)                          # (1, D)

    # Additive mask bias (bf16, half the DMA bytes; 0 / -1e9 exact enough
    # since exp underflows to 0 either way).  A 2-D mask is shared across the
    # batch with a constant index_map; a 3-D mask keeps per-batch blocks.
    neg = jnp.float32(-1e9)
    if mask.ndim == 2:
        bias = jnp.where(mask == 0, neg, 0.0).astype(jnp.bfloat16)[None]
        bias_map = lambda b, k: (0, 0, 0)
    else:
        bias = jnp.where(mask == 0, neg, 0.0).astype(jnp.bfloat16)
        bias_map = lambda b, k: (b, 0, 0)

    tff = _ff_tile(d_ff)
    n_ff = d_ff // tff

    in_specs = [
        pl.BlockSpec((1, S, D), lambda b, k: (b, 0, 0)),       # x
        pl.BlockSpec((1, S, S), bias_map),                     # mask bias
        pl.BlockSpec((D, 3 * D), lambda b, k: (0, 0)),         # Wqkv
        pl.BlockSpec((1, 3 * D), lambda b, k: (0, 0)),         # bqkv
        pl.BlockSpec((D, D), lambda b, k: (0, 0)),             # Wo
        pl.BlockSpec((1, D), lambda b, k: (0, 0)),             # bo
        pl.BlockSpec((D, tff), lambda b, k: (0, k)),           # W1 tile (over d_ff)
        pl.BlockSpec((1, tff), lambda b, k: (0, k)),           # b1 tile
        pl.BlockSpec((tff, D), lambda b, k: (k, 0)),           # W2 tile (over d_ff)
        pl.BlockSpec((1, D), lambda b, k: (0, 0)),             # b2
    ]
    out_spec = pl.BlockSpec((1, S, D), lambda b, k: (b, 0, 0))
    scratch = [pltpu.VMEM((S, D), jnp.float32),    # y = LN(x + attn)
               pltpu.VMEM((S, D), jnp.float32)]    # FFN accumulator

    grid_spec = pltpu.PrefetchScalarGridSpec(
        num_scalar_prefetch=0,
        grid=(B, n_ff),
        in_specs=in_specs,
        out_specs=out_spec,
        scratch_shapes=scratch,
    )

    kernel = functools.partial(encoder_layer_kernel, num_heads=num_heads)
    return pl.pallas_call(
        kernel,
        out_shape=jax.ShapeDtypeStruct((B, S, D), jnp.float32),
        grid_spec=grid_spec,
        compiler_params=pltpu.CompilerParams(
            dimension_semantics=("parallel", "arbitrary"),
            # <= 48 MiB keeps headroom on v7x (64 MiB physical); raise toward
            # 64-100 MiB on v5e/v6e when growing tiles for large shapes.
            vmem_limit_bytes=48 * 1024 * 1024),
    )(x, bias, wqkv, bqkv, wo, bo, w1, b1, w2, b2)


def reference_encoder_layer(x, mask, p, num_heads):
    """Pure-JAX f32 reference mirroring the PyTorch module (dropout p=0)."""
    B, S, D = x.shape
    dh = D // num_heads

    def lin(z, w, b):
        return z @ w.T + b

    q = lin(x, p['wq'], p['bq']).reshape(B, S, num_heads, dh).transpose(0, 2, 1, 3)
    k = lin(x, p['wk'], p['bk']).reshape(B, S, num_heads, dh).transpose(0, 2, 1, 3)
    v = lin(x, p['wv'], p['bv']).reshape(B, S, num_heads, dh).transpose(0, 2, 1, 3)
    logits = jnp.einsum('bhsd,bhtd->bhst', q, k) / math.sqrt(dh)
    mask_b = mask[None, None] if mask.ndim == 2 else mask[:, None]
    logits = jnp.where(mask_b == 0.0, -1.0e9, logits)
    probs = jax.nn.softmax(logits, axis=-1)
    attn = jnp.einsum('bhst,bhtd->bhsd', probs, v).transpose(0, 2, 1, 3).reshape(B, S, D)
    attn = lin(attn, p['wo'], p['bo'])

    def ln(z):
        mu = z.mean(-1, keepdims=True)
        var = ((z - mu) ** 2).mean(-1, keepdims=True)
        return (z - mu) / jnp.sqrt(var + 1e-5)

    y = ln(x + attn)
    o = lin(jax.nn.relu(lin(y, p['w1'], p['b1'])), p['w2'], p['b2'])
    return ln(y + o)


def make_params(key, d_model, d_ff):
    ks = jax.random.split(key, 12)
    s = 0.1

    def w(k, shape):
        return jax.random.normal(k, shape, dtype=jnp.float32) * s

    return {
        'wq': w(ks[0], (d_model, d_model)), 'bq': w(ks[1], (1, d_model)),
        'wk': w(ks[2], (d_model, d_model)), 'bk': w(ks[3], (1, d_model)),
        'wv': w(ks[4], (d_model, d_model)), 'bv': w(ks[5], (1, d_model)),
        'wo': w(ks[6], (d_model, d_model)), 'bo': w(ks[7], (1, d_model)),
        'w1': w(ks[8], (d_ff, d_model)),    'b1': w(ks[9], (1, d_ff)),
        'w2': w(ks[10], (d_model, d_ff)),   'b2': w(ks[11], (1, d_model)),
    }


if __name__ == "__main__":
    B, S, d_model, num_heads, d_ff = 2, 8, 32, 4, 64
    # dropout = 0.0 so F.dropout is the identity (deterministic)

    key = jax.random.PRNGKey(0)
    k_x, k_p = jax.random.split(key)
    x = jax.random.normal(k_x, (B, S, d_model), dtype=jnp.float32)
    # causal mask (1 = attend, 0 = masked), shared by every batch element
    causal = jnp.tril(jnp.ones((S, S), dtype=jnp.float32))
    params = make_params(k_p, d_model, d_ff)

    out = encoder_layer(x, causal, params, num_heads)
    out = jax.block_until_ready(out)

    ref = reference_encoder_layer(x, causal, params, num_heads)
    # Tolerances deliberately relaxed: kernel runs MXU matmuls with bf16
    # inputs (f32 accumulation) against an all-f32 reference.
    np.testing.assert_allclose(np.asarray(out), np.asarray(ref),
                               atol=5e-2, rtol=5e-2)

    print("KERNEL_OK")
</pallas_src>

<mosaic_0001>
module attributes {stable_mosaic.version = 11 : i64} {
  func.func @encoder_layer_kernel(%arg0: i32, %arg1: i32, %arg2: memref<1x8x32xf32, #tpu.memory_space<vmem>>, %arg3: memref<1x8x8xbf16, #tpu.memory_space<vmem>>, %arg4: memref<32x96xbf16, #tpu.memory_space<vmem>>, %arg5: memref<1x96xf32, #tpu.memory_space<vmem>>, %arg6: memref<32x32xbf16, #tpu.memory_space<vmem>>, %arg7: memref<1x32xf32, #tpu.memory_space<vmem>>, %arg8: memref<32x64xbf16, #tpu.memory_space<vmem>>, %arg9: memref<1x64xf32, #tpu.memory_space<vmem>>, %arg10: memref<64x32xbf16, #tpu.memory_space<vmem>>, %arg11: memref<1x32xf32, #tpu.memory_space<vmem>>, %arg12: memref<1x8x32xf32, #tpu.memory_space<vmem>>, %arg13: memref<8x32xf32, #tpu.memory_space<vmem>>, %arg14: memref<8x32xf32, #tpu.memory_space<vmem>>) attributes {dimension_semantics = [#tpu.dimension_semantics<parallel>, #tpu.dimension_semantics<arbitrary>], iteration_bounds = array<i64: 2, 1>, scalar_prefetch = 0 : i64, scratch_operands = 2 : i64, tpu.core_type = #tpu.core_type<tc>, window_params = [{transform_indices = @transform_0, window_bounds = array<i64: 1, 8, 32>}, {pipeline_mode = #tpu.pipeline_mode<synchronous>, transform_indices = @transform_1, window_bounds = array<i64: 1, 8, 8>}, {pipeline_mode = #tpu.pipeline_mode<synchronous>, transform_indices = @transform_2, window_bounds = array<i64: 32, 96>}, {pipeline_mode = #tpu.pipeline_mode<synchronous>, transform_indices = @transform_3, window_bounds = array<i64: 1, 96>}, {pipeline_mode = #tpu.pipeline_mode<synchronous>, transform_indices = @transform_4, window_bounds = array<i64: 32, 32>}, {pipeline_mode = #tpu.pipeline_mode<synchronous>, transform_indices = @transform_5, window_bounds = array<i64: 1, 32>}, {transform_indices = @transform_6, window_bounds = array<i64: 32, 64>}, {transform_indices = @transform_7, window_bounds = array<i64: 1, 64>}, {transform_indices = @transform_8, window_bounds = array<i64: 64, 32>}, {pipeline_mode = #tpu.pipeline_mode<synchronous>, transform_indices = @transform_9, window_bounds = array<i64: 1, 32>}, {transform_indices = @transform_10, window_bounds = array<i64: 1, 8, 32>}]} {
    %c0_i32 = arith.constant 0 : i32
    %0 = arith.cmpi eq, %arg1, %c0_i32 : i32
    %1 = arith.extui %0 : i1 to i32
    %c0_i32_0 = arith.constant 0 : i32
    %2 = arith.cmpi ne, %1, %c0_i32_0 : i32
    scf.if %2 {
      %c0_16 = arith.constant 0 : index
      %c0_17 = arith.constant 0 : index
      %c0_18 = arith.constant 0 : index
      %21 = vector.load %arg2[%c0_16, %c0_17, %c0_18] : memref<1x8x32xf32, #tpu.memory_space<vmem>>, vector<1x8x32xf32>
      %22 = vector.shape_cast %21 : vector<1x8x32xf32> to vector<8x32xf32>
      %23 = arith.truncf %22 : vector<8x32xf32> to vector<8x32xbf16>
      %c0_19 = arith.constant 0 : index
      %c0_20 = arith.constant 0 : index
      %24 = vector.load %arg4[%c0_19, %c0_20] : memref<32x96xbf16, #tpu.memory_space<vmem>>, vector<32x96xbf16>
      %cst_21 = arith.constant dense<0.000000e+00> : vector<8x96xf32>
      %25 = tpu.matmul %23, %24, %cst_21 {dimension_numbers = #tpu.dot_dimension_numbers<[1], [0], [0], [1], [0, 0, 1, 1], [], []>} : vector<8x32xbf16>, vector<32x96xbf16>, vector<8x96xf32> -> vector<8x96xf32>
      %c0_22 = arith.constant 0 : index
      %c0_23 = arith.constant 0 : index
      %26 = vector.load %arg5[%c0_22, %c0_23] : memref<1x96xf32, #tpu.memory_space<vmem>>, vector<1x96xf32>
      %27 = vector.broadcast %26 : vector<1x96xf32> to vector<8x96xf32>
      %28 = arith.addf %25, %27 : vector<8x96xf32>
      %29 = vector.extract_strided_slice %28 {offsets = [0, 0], sizes = [8, 32], strides = [1, 1]} : vector<8x96xf32> to vector<8x32xf32>
      %30 = vector.extract_strided_slice %28 {offsets = [0, 32], sizes = [8, 32], strides = [1, 1]} : vector<8x96xf32> to vector<8x32xf32>
      %31 = vector.extract_strided_slice %28 {offsets = [0, 64], sizes = [8, 32], strides = [1, 1]} : vector<8x96xf32> to vector<8x32xf32>
      %32 = vector.extract_strided_slice %29 {offsets = [0, 0], sizes = [8, 8], strides = [1, 1]} : vector<8x32xf32> to vector<8x8xf32>
      %33 = vector.extract_strided_slice %29 {offsets = [0, 8], sizes = [8, 8], strides = [1, 1]} : vector<8x32xf32> to vector<8x8xf32>
      %34 = vector.extract_strided_slice %29 {offsets = [0, 16], sizes = [8, 8], strides = [1, 1]} : vector<8x32xf32> to vector<8x8xf32>
      %35 = vector.extract_strided_slice %29 {offsets = [0, 24], sizes = [8, 8], strides = [1, 1]} : vector<8x32xf32> to vector<8x8xf32>
      %36 = vector.shape_cast %32 : vector<8x8xf32> to vector<1x8x8xf32>
      %37 = vector.shape_cast %33 : vector<8x8xf32> to vector<1x8x8xf32>
      %38 = vector.shape_cast %34 : vector<8x8xf32> to vector<1x8x8xf32>
      %39 = vector.shape_cast %35 : vector<8x8xf32> to vector<1x8x8xf32>
      %40 = tpu.concatenate %36, %37, %38, %39 in 0 : vector<1x8x8xf32>, vector<1x8x8xf32>, vector<1x8x8xf32>, vector<1x8x8xf32> -> vector<4x8x8xf32>
      %41 = arith.truncf %40 : vector<4x8x8xf32> to vector<4x8x8xbf16>
      %42 = vector.extract_strided_slice %30 {offsets = [0, 0], sizes = [8, 8], strides = [1, 1]} : vector<8x32xf32> to vector<8x8xf32>
      %43 = vector.extract_strided_slice %30 {offsets = [0, 8], sizes = [8, 8], strides = [1, 1]} : vector<8x32xf32> to vector<8x8xf32>
      %44 = vector.extract_strided_slice %30 {offsets = [0, 16], sizes = [8, 8], strides = [1, 1]} : vector<8x32xf32> to vector<8x8xf32>
      %45 = vector.extract_strided_slice %30 {offsets = [0, 24], sizes = [8, 8], strides = [1, 1]} : vector<8x32xf32> to vector<8x8xf32>
      %46 = vector.shape_cast %42 : vector<8x8xf32> to vector<1x8x8xf32>
      %47 = vector.shape_cast %43 : vector<8x8xf32> to vector<1x8x8xf32>
      %48 = vector.shape_cast %44 : vector<8x8xf32> to vector<1x8x8xf32>
      %49 = vector.shape_cast %45 : vector<8x8xf32> to vector<1x8x8xf32>
      %50 = tpu.concatenate %46, %47, %48, %49 in 0 : vector<1x8x8xf32>, vector<1x8x8xf32>, vector<1x8x8xf32>, vector<1x8x8xf32> -> vector<4x8x8xf32>
      %51 = arith.truncf %50 : vector<4x8x8xf32> to vector<4x8x8xbf16>
      %52 = vector.extract_strided_slice %31 {offsets = [0, 0], sizes = [8, 8], strides = [1, 1]} : vector<8x32xf32> to vector<8x8xf32>
      %53 = vector.extract_strided_slice %31 {offsets = [0, 8], sizes = [8, 8], strides = [1, 1]} : vector<8x32xf32> to vector<8x8xf32>
      %54 = vector.extract_strided_slice %31 {offsets = [0, 16], sizes = [8, 8], strides = [1, 1]} : vector<8x32xf32> to vector<8x8xf32>
      %55 = vector.extract_strided_slice %31 {offsets = [0, 24], sizes = [8, 8], strides = [1, 1]} : vector<8x32xf32> to vector<8x8xf32>
      %56 = vector.shape_cast %52 : vector<8x8xf32> to vector<1x8x8xf32>
      %57 = vector.shape_cast %53 : vector<8x8xf32> to vector<1x8x8xf32>
      %58 = vector.shape_cast %54 : vector<8x8xf32> to vector<1x8x8xf32>
      %59 = vector.shape_cast %55 : vector<8x8xf32> to vector<1x8x8xf32>
      %60 = tpu.concatenate %56, %57, %58, %59 in 0 : vector<1x8x8xf32>, vector<1x8x8xf32>, vector<1x8x8xf32>, vector<1x8x8xf32> -> vector<4x8x8xf32>
      %61 = arith.truncf %60 : vector<4x8x8xf32> to vector<4x8x8xbf16>
      %c0_24 = arith.constant 0 : index
      %c0_25 = arith.constant 0 : index
      %c0_26 = arith.constant 0 : index
      %62 = vector.load %arg3[%c0_24, %c0_25, %c0_26] : memref<1x8x8xbf16, #tpu.memory_space<vmem>>, vector<1x8x8xbf16>
      %63 = vector.shape_cast %62 : vector<1x8x8xbf16> to vector<8x8xbf16>
      %64 = arith.extf %63 : vector<8x8xbf16> to vector<8x8xf32>
      "tpu.trace_start"() <{level = 10 : i32, message = "hqd,hkd->hqk"}> : () -> ()
      %cst_27 = arith.constant dense<0.000000e+00> : vector<4x8x8xf32>
      %65 = tpu.matmul %41, %51, %cst_27 {dimension_numbers = #tpu.dot_dimension_numbers<[2], [2], [1], [1], [0, 0, 0, 1, 1, 1], [0], [0]>} : vector<4x8x8xbf16>, vector<4x8x8xbf16>, vector<4x8x8xf32> -> vector<4x8x8xf32>
      "tpu.trace_stop"() : () -> ()
      %66 = vector.shape_cast %64 : vector<8x8xf32> to vector<1x8x8xf32>
      %67 = vector.broadcast %66 : vector<1x8x8xf32> to vector<4x8x8xf32>
      %68 = arith.addf %65, %67 : vector<4x8x8xf32>
      %cst_28 = arith.constant dense<0xFF800000> : vector<4x8xf32>
      %69 = vector.multi_reduction <maximumf>, %68, %cst_28 [2] : vector<4x8x8xf32> to vector<4x8xf32>
      %70 = vector.shape_cast %69 : vector<4x8xf32> to vector<4x8x1xf32>
      %71 = vector.broadcast %70 : vector<4x8x1xf32> to vector<4x8x8xf32>
      %72 = arith.subf %68, %71 : vector<4x8x8xf32>
      %73 = math.exp %72 : vector<4x8x8xf32>
      %cst_29 = arith.constant dense<0.000000e+00> : vector<4x8xf32>
      %74 = vector.multi_reduction <add>, %73, %cst_29 [2] : vector<4x8x8xf32> to vector<4x8xf32>
      %75 = vector.shape_cast %74 : vector<4x8xf32> to vector<4x8x1xf32>
      %76 = tpu.reciprocal %75 {approx = true} : vector<4x8x1xf32> -> vector<4x8x1xf32>
      %77 = vector.broadcast %76 : vector<4x8x1xf32> to vector<4x8x8xf32>
      %78 = arith.mulf %73, %77 : vector<4x8x8xf32>
      %79 = arith.truncf %78 : vector<4x8x8xf32> to vector<4x8x8xbf16>
      "tpu.trace_start"() <{level = 10 : i32, message = "hqk,hkd->hqd"}> : () -> ()
      %cst_30 = arith.constant dense<0.000000e+00> : vector<4x8x8xf32>
      %80 = tpu.matmul %79, %61, %cst_30 {dimension_numbers = #tpu.dot_dimension_numbers<[2], [1], [1], [2], [0, 0, 0, 1, 1, 2], [0], [0]>} : vector<4x8x8xbf16>, vector<4x8x8xbf16>, vector<4x8x8xf32> -> vector<4x8x8xf32>
      "tpu.trace_stop"() : () -> ()
      %81 = vector.extract_strided_slice %80 {offsets = [0, 0, 0], sizes = [1, 8, 8], strides = [1, 1, 1]} : vector<4x8x8xf32> to vector<1x8x8xf32>
      %82 = vector.shape_cast %81 : vector<1x8x8xf32> to vector<8x8xf32>
      %83 = vector.extract_strided_slice %80 {offsets = [1, 0, 0], sizes = [1, 8, 8], strides = [1, 1, 1]} : vector<4x8x8xf32> to vector<1x8x8xf32>
      %84 = vector.shape_cast %83 : vector<1x8x8xf32> to vector<8x8xf32>
      %85 = vector.extract_strided_slice %80 {offsets = [2, 0, 0], sizes = [1, 8, 8], strides = [1, 1, 1]} : vector<4x8x8xf32> to vector<1x8x8xf32>
      %86 = vector.shape_cast %85 : vector<1x8x8xf32> to vector<8x8xf32>
      %87 = vector.extract_strided_slice %80 {offsets = [3, 0, 0], sizes = [1, 8, 8], strides = [1, 1, 1]} : vector<4x8x8xf32> to vector<1x8x8xf32>
      %88 = vector.shape_cast %87 : vector<1x8x8xf32> to vector<8x8xf32>
      %89 = tpu.concatenate %82, %84, %86, %88 in 1 : vector<8x8xf32>, vector<8x8xf32>, vector<8x8xf32>, vector<8x8xf32> -> vector<8x32xf32>
      %90 = arith.truncf %89 : vector<8x32xf32> to vector<8x32xbf16>
      %c0_31 = arith.constant 0 : index
      %c0_32 = arith.constant 0 : index
      %91 = vector.load %arg6[%c0_31, %c0_32] : memref<32x32xbf16, #tpu.memory_space<vmem>>, vector<32x32xbf16>
      %cst_33 = arith.constant dense<0.000000e+00> : vector<8x32xf32>
      %92 = tpu.matmul %90, %91, %cst_33 {dimension_numbers = #tpu.dot_dimension_numbers<[1], [0], [0], [1], [0, 0, 1, 1], [], []>} : vector<8x32xbf16>, vector<32x32xbf16>, vector<8x32xf32> -> vector<8x32xf32>
      %c0_34 = arith.constant 0 : index
      %c0_35 = arith.constant 0 : index
      %93 = vector.load %arg7[%c0_34, %c0_35] : memref<1x32xf32, #tpu.memory_space<vmem>>, vector<1x32xf32>
      %94 = vector.broadcast %93 : vector<1x32xf32> to vector<8x32xf32>
      %95 = arith.addf %92, %94 : vector<8x32xf32>
      %96 = arith.addf %22, %95 : vector<8x32xf32>
      %cst_36 = arith.constant dense<0.000000e+00> : vector<8xf32>
      %97 = vector.multi_reduction <add>, %96, %cst_36 [1] : vector<8x32xf32> to vector<8xf32>
      %98 = vector.shape_cast %97 : vector<8xf32> to vector<8x1xf32>
      %cst_37 = arith.constant 3.200000e+01 : f32
      %99 = vector.broadcast %cst_37 : f32 to vector<8x1xf32>
      %100 = arith.divf %98, %99 : vector<8x1xf32>
      %101 = vector.broadcast %100 : vector<8x1xf32> to vector<8x32xf32>
      %102 = arith.subf %96, %101 : vector<8x32xf32>
      %103 = arith.mulf %102, %102 : vector<8x32xf32>
      %cst_38 = arith.constant dense<0.000000e+00> : vector<8xf32>
      %104 = vector.multi_reduction <add>, %103, %cst_38 [1] : vector<8x32xf32> to vector<8xf32>
      %105 = vector.shape_cast %104 : vector<8xf32> to vector<8x1xf32>
      %cst_39 = arith.constant 3.200000e+01 : f32
      %106 = vector.broadcast %cst_39 : f32 to vector<8x1xf32>
      %107 = arith.divf %105, %106 : vector<8x1xf32>
      %cst_40 = arith.constant 9.99999974E-6 : f32
      %108 = vector.broadcast %cst_40 : f32 to vector<8x1xf32>
      %109 = arith.addf %107, %108 : vector<8x1xf32>
      %110 = math.rsqrt %109 : vector<8x1xf32>
      %111 = vector.broadcast %110 : vector<8x1xf32> to vector<8x32xf32>
      %112 = arith.mulf %102, %111 : vector<8x32xf32>
      %c0_41 = arith.constant 0 : index
      %c0_42 = arith.constant 0 : index
      %113 = vector.load %arg13[%c0_41, %c0_42] : memref<8x32xf32, #tpu.memory_space<vmem>>, vector<8x32xf32>
      tpu.vector_store %arg13[%c0_41, %c0_42], %112 {strides = array<i32>} : memref<8x32xf32, #tpu.memory_space<vmem>>, vector<8x32xf32>,
      %cst_43 = arith.constant 0.000000e+00 : f32
      %114 = vector.broadcast %cst_43 : f32 to vector<8x32xf32>
      %c0_44 = arith.constant 0 : index
      %c0_45 = arith.constant 0 : index
      %115 = vector.load %arg14[%c0_44, %c0_45] : memref<8x32xf32, #tpu.memory_space<vmem>>, vector<8x32xf32>
      tpu.vector_store %arg14[%c0_44, %c0_45], %114 {strides = array<i32>} : memref<8x32xf32, #tpu.memory_space<vmem>>, vector<8x32xf32>,
    } else {
    }
    %c0 = arith.constant 0 : index
    %c0_1 = arith.constant 0 : index
    %3 = vector.load %arg13[%c0, %c0_1] : memref<8x32xf32, #tpu.memory_space<vmem>>, vector<8x32xf32>
    %4 = arith.truncf %3 : vector<8x32xf32> to vector<8x32xbf16>
    %c0_2 = arith.constant 0 : index
    %c0_3 = arith.constant 0 : index
    %5 = vector.load %arg8[%c0_2, %c0_3] : memref<32x64xbf16, #tpu.memory_space<vmem>>, vector<32x64xbf16>
    %cst = arith.constant dense<0.000000e+00> : vector<8x64xf32>
    %6 = tpu.matmul %4, %5, %cst {dimension_numbers = #tpu.dot_dimension_numbers<[1], [0], [0], [1], [0, 0, 1, 1], [], []>} : vector<8x32xbf16>, vector<32x64xbf16>, vector<8x64xf32> -> vector<8x64xf32>
    %c0_4 = arith.constant 0 : index
    %c0_5 = arith.constant 0 : index
    %7 = vector.load %arg9[%c0_4, %c0_5] : memref<1x64xf32, #tpu.memory_space<vmem>>, vector<1x64xf32>
    %8 = vector.broadcast %7 : vector<1x64xf32> to vector<8x64xf32>
    %9 = arith.addf %6, %8 : vector<8x64xf32>
    %cst_6 = arith.constant 0.000000e+00 : f32
    %10 = vector.broadcast %cst_6 : f32 to vector<8x64xf32>
    %11 = arith.maximumf %9, %10 : vector<8x64xf32>
    %c0_7 = arith.constant 0 : index
    %c0_8 = arith.constant 0 : index
    %12 = vector.load %arg14[%c0_7, %c0_8] : memref<8x32xf32, #tpu.memory_space<vmem>>, vector<8x32xf32>
    %13 = arith.truncf %11 : vector<8x64xf32> to vector<8x64xbf16>
    %c0_9 = arith.constant 0 : index
    %c0_10 = arith.constant 0 : index
    %14 = vector.load %arg10[%c0_9, %c0_10] : memref<64x32xbf16, #tpu.memory_space<vmem>>, vector<64x32xbf16>
    %cst_11 = arith.constant dense<0.000000e+00> : vector<8x32xf32>
    %15 = tpu.matmul %13, %14, %cst_11 {dimension_numbers = #tpu.dot_dimension_numbers<[1], [0], [0], [1], [0, 0, 1, 1], [], []>} : vector<8x64xbf16>, vector<64x32xbf16>, vector<8x32xf32> -> vector<8x32xf32>
    %16 = arith.addf %12, %15 : vector<8x32xf32>
    %c0_12 = arith.constant 0 : index
    %c0_13 = arith.constant 0 : index
    %17 = vector.load %arg14[%c0_12, %c0_13] : memref<8x32xf32, #tpu.memory_space<vmem>>, vector<8x32xf32>
    tpu.vector_store %arg14[%c0_12, %c0_13], %16 {strides = array<i32>} : memref<8x32xf32, #tpu.memory_space<vmem>>, vector<8x32xf32>,
    %c0_i32_14 = arith.constant 0 : i32
    %18 = arith.cmpi eq, %arg1, %c0_i32_14 : i32
    %19 = arith.extui %18 : i1 to i32
    %c0_i32_15 = arith.constant 0 : i32
    %20 = arith.cmpi ne, %19, %c0_i32_15 : i32
    scf.if %20 {
      %c0_16 = arith.constant 0 : index
      %c0_17 = arith.constant 0 : index
      %21 = vector.load %arg14[%c0_16, %c0_17] : memref<8x32xf32, #tpu.memory_space<vmem>>, vector<8x32xf32>
      %c0_18 = arith.constant 0 : index
      %c0_19 = arith.constant 0 : index
      %22 = vector.load %arg11[%c0_18, %c0_19] : memref<1x32xf32, #tpu.memory_space<vmem>>, vector<1x32xf32>
      %23 = vector.broadcast %22 : vector<1x32xf32> to vector<8x32xf32>
      %24 = arith.addf %21, %23 : vector<8x32xf32>
      %c0_20 = arith.constant 0 : index
      %c0_21 = arith.constant 0 : index
      %25 = vector.load %arg13[%c0_20, %c0_21] : memref<8x32xf32, #tpu.memory_space<vmem>>, vector<8x32xf32>
      %26 = arith.addf %25, %24 : vector<8x32xf32>
      %cst_22 = arith.constant dense<0.000000e+00> : vector<8xf32>
      %27 = vector.multi_reduction <add>, %26, %cst_22 [1] : vector<8x32xf32> to vector<8xf32>
      %28 = vector.shape_cast %27 : vector<8xf32> to vector<8x1xf32>
      %cst_23 = arith.constant 3.200000e+01 : f32
      %29 = vector.broadcast %cst_23 : f32 to vector<8x1xf32>
      %30 = arith.divf %28, %29 : vector<8x1xf32>
      %31 = vector.broadcast %30 : vector<8x1xf32> to vector<8x32xf32>
      %32 = arith.subf %26, %31 : vector<8x32xf32>
      %33 = arith.mulf %32, %32 : vector<8x32xf32>
      %cst_24 = arith.constant dense<0.000000e+00> : vector<8xf32>
      %34 = vector.multi_reduction <add>, %33, %cst_24 [1] : vector<8x32xf32> to vector<8xf32>
      %35 = vector.shape_cast %34 : vector<8xf32> to vector<8x1xf32>
      %cst_25 = arith.constant 3.200000e+01 : f32
      %36 = vector.broadcast %cst_25 : f32 to vector<8x1xf32>
      %37 = arith.divf %35, %36 : vector<8x1xf32>
      %cst_26 = arith.constant 9.99999974E-6 : f32
      %38 = vector.broadcast %cst_26 : f32 to vector<8x1xf32>
      %39 = arith.addf %37, %38 : vector<8x1xf32>
      %40 = math.rsqrt %39 : vector<8x1xf32>
      %41 = vector.broadcast %40 : vector<8x1xf32> to vector<8x32xf32>
      %42 = arith.mulf %32, %41 : vector<8x32xf32>
      %c0_27 = arith.constant 0 : index
      %c0_28 = arith.constant 0 : index
      %c0_29 = arith.constant 0 : index
      %43 = vector.load %arg12[%c0_27, %c0_28, %c0_29] : memref<1x8x32xf32, #tpu.memory_space<vmem>>, vector<1x8x32xf32>
      %44 = vector.shape_cast %43 : vector<1x8x32xf32> to vector<8x32xf32>
      %45 = vector.shape_cast %42 : vector<8x32xf32> to vector<1x8x32xf32>
      tpu.vector_store %arg12[%c0_27, %c0_28, %c0_29], %45 {strides = array<i32>} : memref<1x8x32xf32, #tpu.memory_space<vmem>>, vector<1x8x32xf32>,
    } else {
    }
    return
  }
  func.func @transform_0(%arg0: i32, %arg1: i32) -> (i32, i32, i32) {
    %c0_i32 = arith.constant 0 : i32
    %c0_i32_0 = arith.constant 0 : i32
    %c0_i32_1 = arith.constant 0 : i32
    return %arg0, %c0_i32, %c0_i32_0 : i32, i32, i32
  }
  func.func @transform_1(%arg0: i32, %arg1: i32) -> (i32, i32, i32) {
    %c0_i32 = arith.constant 0 : i32
    %c0_i32_0 = arith.constant 0 : i32
    %c0_i32_1 = arith.constant 0 : i32
    %c0_i32_2 = arith.constant 0 : i32
    return %c0_i32, %c0_i32_0, %c0_i32_1 : i32, i32, i32
  }
  func.func @transform_2(%arg0: i32, %arg1: i32) -> (i32, i32) {
    %c0_i32 = arith.constant 0 : i32
    %c0_i32_0 = arith.constant 0 : i32
    %c0_i32_1 = arith.constant 0 : i32
    return %c0_i32, %c0_i32_0 : i32, i32
  }
  func.func @transform_3(%arg0: i32, %arg1: i32) -> (i32, i32) {
    %c0_i32 = arith.constant 0 : i32
    %c0_i32_0 = arith.constant 0 : i32
    %c0_i32_1 = arith.constant 0 : i32
    return %c0_i32, %c0_i32_0 : i32, i32
  }
  func.func @transform_4(%arg0: i32, %arg1: i32) -> (i32, i32) {
    %c0_i32 = arith.constant 0 : i32
    %c0_i32_0 = arith.constant 0 : i32
    %c0_i32_1 = arith.constant 0 : i32
    return %c0_i32, %c0_i32_0 : i32, i32
  }
  func.func @transform_5(%arg0: i32, %arg1: i32) -> (i32, i32) {
    %c0_i32 = arith.constant 0 : i32
    %c0_i32_0 = arith.constant 0 : i32
    %c0_i32_1 = arith.constant 0 : i32
    return %c0_i32, %c0_i32_0 : i32, i32
  }
  func.func @transform_6(%arg0: i32, %arg1: i32) -> (i32, i32) {
    %c0_i32 = arith.constant 0 : i32
    %c0_i32_0 = arith.constant 0 : i32
    return %c0_i32, %arg1 : i32, i32
  }
  func.func @transform_7(%arg0: i32, %arg1: i32) -> (i32, i32) {
    %c0_i32 = arith.constant 0 : i32
    %c0_i32_0 = arith.constant 0 : i32
    return %c0_i32, %arg1 : i32, i32
  }
  func.func @transform_8(%arg0: i32, %arg1: i32) -> (i32, i32) {
    %c0_i32 = arith.constant 0 : i32
    %c0_i32_0 = arith.constant 0 : i32
    return %arg1, %c0_i32 : i32, i32
  }
  func.func @transform_9(%arg0: i32, %arg1: i32) -> (i32, i32) {
    %c0_i32 = arith.constant 0 : i32
    %c0_i32_0 = arith.constant 0 : i32
    %c0_i32_1 = arith.constant 0 : i32
    return %c0_i32, %c0_i32_0 : i32, i32
  }
  func.func @transform_10(%arg0: i32, %arg1: i32) -> (i32, i32, i32) {
    %c0_i32 = arith.constant 0 : i32
    %c0_i32_0 = arith.constant 0 : i32
    %c0_i32_1 = arith.constant 0 : i32
    return %arg0, %c0_i32, %c0_i32_0 : i32, i32, i32
  }
}

</mosaic_0001>

<llo_original>
// kernel: tpu_custom_call.1
$region0: #{tpu_custom_call.1}
  #allocation0 [shape = 'u32[]', space=smem, size = 0x4, offset = 0x4, fixed_abs, tag = 'smem constant byte address 0x4 - core index']
  #allocation1 [shape = 'u32[72,128]{1,0:T(1,128)}', space=vmem, size = 0x9000, scoped, tag = 'internal scratch']
  #allocation2 [shape = 'f32[8,32]{1,0:T(8,128)}', space=vmem, size = 0x1000, scoped, tag = 'scratch operand']
  #allocation3 [shape = 'f32[8,32]{1,0:T(8,128)}', space=vmem, size = 0x1000, scoped, tag = 'scratch operand']
  %s0 = inlined_call_operand.vmem [shape: f32[2,8,32], index: 0, kind: input, shape index: {}]
  %s1 = inlined_call_operand.hbm [shape: bf16[1,8,8], index: 1, kind: input, shape index: {}]
  %s2 = inlined_call_operand.vmem [shape: bf16[32,96], index: 2, kind: input, shape index: {}]
  %s3 = inlined_call_operand.vmem [shape: f32[1,96], index: 3, kind: input, shape index: {}]
  %s4 = inlined_call_operand.vmem [shape: bf16[32,32], index: 4, kind: input, shape index: {}]
  %s5 = inlined_call_operand.vmem [shape: f32[1,32], index: 5, kind: input, shape index: {}]
  %s6 = inlined_call_operand.hbm [shape: bf16[32,64], index: 6, kind: input, shape index: {}]
  %s7 = inlined_call_operand.vmem [shape: f32[1,64], index: 7, kind: input, shape index: {}]
  %s8 = inlined_call_operand.vmem [shape: bf16[64,32], index: 8, kind: input, shape index: {}]
  %s9 = inlined_call_operand.vmem [shape: f32[1,32], index: 9, kind: input, shape index: {}]
  %s10 = inlined_call_operand.hbm [shape: f32[2,8,32], index: 10, kind: output, shape index: {}]
  %s11 = sld [smem:[#allocation0]]
  $region89: #{tpu_custom_call.1} parent=0
    _
  %s13 = ssub.s32 1, %s11
  %s14 = scalar_select 0, %s13, %s11
  $region1: #{tpu_custom_call.1} parent=0
    #allocation4 [shape = 'u8[2048]{0}', space=vmem, size = 0x800, scoped, tag = 'input window, operand 1, single buffered']
    #allocation5 [shape = 's32[2]{0}', space=sflag, size = 0x8, scoped, tag = 'scoped memory for tpu_custom_call.1']
    #allocation6 [shape = 's32[2]{0}', space=sflag, size = 0x8, scoped, tag = 'scoped memory for tpu_custom_call.1']
    #allocation7 [shape = 'u8[8192]{0}', space=vmem, size = 0x2000, scoped, tag = 'input window, operand 6, single buffered']
    #allocation8 [shape = 's32[1]{0}', space=sflag, size = 0x4, scoped, tag = 'scoped memory for tpu_custom_call.1']
    #allocation9 [shape = 'u8[8192]{0}', space=vmem, size = 0x2000, scoped, tag = 'output window, operand 0']
    %15 = vsyncpa [#allocation5], 0
    %16 = vsyncpa [#allocation8], 0
    %17 = vsyncpa [#allocation6], 0
    %s18 = scalar_lea.sflag [#allocation6], 1
    %19 = vsyncpa %s18, 0
    loop: start=0, step=1, limit=4
    $region2: #{tpu_custom_call.1} parent=1 // loop_pre_header
      _
    $region3: #{tpu_custom_call.1} parent=1 // loop_header
      %s21 = sphi 0, %s25
      %p22 = scmp.ge.s32.totalorder %s21, 4
      %s28 = sphi 0, %s40
      %s29 = sphi 0, %s36
      %s30 = sphi 0, %s28
      %s31 = sphi 0, %s29
      %s32 = sphi 0, %s30
      %s33 = sphi 0, %s31
      %s43 = sphi 0, %s45
      %s46 = sphi 0, %s43
      %s47 = sphi 0, %s46
      %s63 = sphi 0, %s47
      %s67 = sphi 0, %s67
      %s69 = sphi 0, %s67
      %s70 = sphi 0, %s69
      %s84 = sphi 0, %s70
      %s88 = sphi 0, %s88
      %s90 = sphi 0, %s88
      %s91 = sphi 0, %s90
      %s105 = sphi 0, %s91
      %s109 = sphi 0, %s109
      %s111 = sphi 0, %s109
      %s112 = sphi 0, %s111
      %s126 = sphi 0, %s112
      %s130 = sphi 0, %s130
      %s132 = sphi 0, %s130
      %s133 = sphi 0, %s132
      %s147 = sphi 0, %s133
      %s151 = sphi 0, %s151
      %s153 = sphi 0, %s151
      %s154 = sphi 0, %s153
      %s168 = sphi 0, %s154
      %s174 = sphi 0, %s176
      %s177 = sphi 0, %s174
      %s178 = sphi 0, %s177
      %s194 = sphi 0, %s178
      %s200 = sphi 0, %s202
      %s203 = sphi 0, %s200
      %s204 = sphi 0, %s203
      %s220 = sphi 0, %s204
      %s226 = sphi 0, %s228
      %s229 = sphi 0, %s226
      %s230 = sphi 0, %s229
      %s246 = sphi 0, %s230
      %s250 = sphi 0, %s250
      %s252 = sphi 0, %s250
      %s253 = sphi 0, %s252
      %s267 = sphi 0, %s253
      %s273 = sphi 0, %s275
      %s276 = sphi 0, %s273
      %s277 = sphi 0, %s276
      %s293 = sphi 0, %s277
    $region4: #{tpu_custom_call.1} parent=1 // loop_header_branch
      %24 = sbr.rel (%p22) target = $region8
    $region5: #{tpu_custom_call.1} parent=1 // loop_body
      %s26 = ssub.s32 %s21, 1
      %s27 = ssub.s32 %s21, 2
      %s34 = sadd.s32 1, %s29
      %p35 = scmp.ge.s32.totalorder %s34, 1
      %s36 = scalar_select %p35, 0, %s34
      %s37 = sadd.s32 1, %s28
      %s38 = scalar_select %p35, %s37, %s28
      %p39 = scmp.ge.s32.totalorder %s38, 2
      %s40 = scalar_select %p39, 0, %s38
      %s41 = ssub.s32 %s28, %s40
      %p42 = scmp.eq.s32.totalorder %s41, 0
      %s44 = sadd.s32 %s43, 1
      %s45 = scalar_select %p42, %s43, %s44
      %p48 = pneg %p42
      %p49 = scmp.eq.s32.totalorder %s21, 1
      %p50 = por %p48, %p49
      %p51 = scmp.ne.s32.totalorder %s43, %s46
      %p52 = scmp.eq.s32.totalorder %s21, 0
      %p53 = por %p51, %p52
      %p54 = scmp.ne.s32.totalorder %s43, %s46
      %p55 = scmp.eq.s32.totalorder %s26, 1
      %p56 = por %p54, %p55
      %p57 = scmp.ne.s32.totalorder %s46, %s47
      %p58 = scmp.eq.s32.totalorder %s26, 0
      %p59 = por %p57, %p58
      %p60 = scmp.ne.s32.totalorder %s46, %s47
      %p61 = scmp.eq.s32.totalorder %s27, 1
      %p62 = por %p60, %p61
      %p64 = scmp.ne.s32.totalorder %s47, %s63
      %p65 = scmp.eq.s32.totalorder %s27, 0
      %p66 = por %p64, %p65
      %s68 = sadd.s32 %s67, 1
      %p71 = scmp.eq.s32.totalorder %s21, 1
      %p72 = scmp.ne.s32.totalorder %s67, %s69
      %p73 = scmp.eq.s32.totalorder %s21, 0
      %p74 = por %p72, %p73
      %p75 = scmp.ne.s32.totalorder %s67, %s69
      %p76 = scmp.eq.s32.totalorder %s26, 1
      %p77 = por %p75, %p76
      %p78 = scmp.ne.s32.totalorder %s69, %s70
      %p79 = scmp.eq.s32.totalorder %s26, 0
      %p80 = por %p78, %p79
      %p81 = scmp.ne.s32.totalorder %s69, %s70
      %p82 = scmp.eq.s32.totalorder %s27, 1
      %p83 = por %p81, %p82
      %p85 = scmp.ne.s32.totalorder %s70, %s84
      %p86 = scmp.eq.s32.totalorder %s27, 0
      %p87 = por %p85, %p86
      %s89 = sadd.s32 %s88, 1
      %p92 = scmp.eq.s32.totalorder %s21, 1
      %p93 = scmp.ne.s32.totalorder %s88, %s90
      %p94 = scmp.eq.s32.totalorder %s21, 0
      %p95 = por %p93, %p94
      %p96 = scmp.ne.s32.totalorder %s88, %s90
      %p97 = scmp.eq.s32.totalorder %s26, 1
      %p98 = por %p96, %p97
      %p99 = scmp.ne.s32.totalorder %s90, %s91
      %p100 = scmp.eq.s32.totalorder %s26, 0
      %p101 = por %p99, %p100
      %p102 = scmp.ne.s32.totalorder %s90, %s91
      %p103 = scmp.eq.s32.totalorder %s27, 1
      %p104 = por %p102, %p103
      %p106 = scmp.ne.s32.totalorder %s91, %s105
      %p107 = scmp.eq.s32.totalorder %s27, 0
      %p108 = por %p106, %p107
      %s110 = sadd.s32 %s109, 1
      %p113 = scmp.eq.s32.totalorder %s21, 1
      %p114 = scmp.ne.s32.totalorder %s109, %s111
      %p115 = scmp.eq.s32.totalorder %s21, 0
      %p116 = por %p114, %p115
      %p117 = scmp.ne.s32.totalorder %s109, %s111
      %p118 = scmp.eq.s32.totalorder %s26, 1
      %p119 = por %p117, %p118
      %p120 = scmp.ne.s32.totalorder %s111, %s112
      %p121 = scmp.eq.s32.totalorder %s26, 0
      %p122 = por %p120, %p121
      %p123 = scmp.ne.s32.totalorder %s111, %s112
      %p124 = scmp.eq.s32.totalorder %s27, 1
      %p125 = por %p123, %p124
      %p127 = scmp.ne.s32.totalorder %s112, %s126
      %p128 = scmp.eq.s32.totalorder %s27, 0
      %p129 = por %p127, %p128
      %s131 = sadd.s32 %s130, 1
      %p134 = scmp.eq.s32.totalorder %s21, 1
      %p135 = scmp.ne.s32.totalorder %s130, %s132
      %p136 = scmp.eq.s32.totalorder %s21, 0
      %p137 = por %p135, %p136
      %p138 = scmp.ne.s32.totalorder %s130, %s132
      %p139 = scmp.eq.s32.totalorder %s26, 1
      %p140 = por %p138, %p139
      %p141 = scmp.ne.s32.totalorder %s132, %s133
      %p142 = scmp.eq.s32.totalorder %s26, 0
      %p143 = por %p141, %p142
      %p144 = scmp.ne.s32.totalorder %s132, %s133
      %p145 = scmp.eq.s32.totalorder %s27, 1
      %p146 = por %p144, %p145
      %p148 = scmp.ne.s32.totalorder %s133, %s147
      %p149 = scmp.eq.s32.totalorder %s27, 0
      %p150 = por %p148, %p149
      %s152 = sadd.s32 %s151, 1
      %p155 = scmp.eq.s32.totalorder %s21, 1
      %p156 = scmp.ne.s32.totalorder %s151, %s153
      %p157 = scmp.eq.s32.totalorder %s21, 0
      %p158 = por %p156, %p157
      %p159 = scmp.ne.s32.totalorder %s151, %s153
      %p160 = scmp.eq.s32.totalorder %s26, 1
      %p161 = por %p159, %p160
      %p162 = scmp.ne.s32.totalorder %s153, %s154
      %p163 = scmp.eq.s32.totalorder %s26, 0
      %p164 = por %p162, %p163
      %p165 = scmp.ne.s32.totalorder %s153, %s154
      %p166 = scmp.eq.s32.totalorder %s27, 1
      %p167 = por %p165, %p166
      %p169 = scmp.ne.s32.totalorder %s154, %s168
      %p170 = scmp.eq.s32.totalorder %s27, 0
      %p171 = por %p169, %p170
      %s172 = ssub.s32 %s29, %s36
      %p173 = scmp.eq.s32.totalorder %s172, 0
      %s175 = sadd.s32 %s174, 1
      %s176 = scalar_select %p173, %s174, %s175
      %p179 = pneg %p173
      %p180 = scmp.eq.s32.totalorder %s21, 1
      %p181 = por %p179, %p180
      %p182 = scmp.ne.s32.totalorder %s174, %s177
      %p183 = scmp.eq.s32.totalorder %s21, 0
      %p184 = por %p182, %p183
      %p185 = scmp.ne.s32.totalorder %s174, %s177
      %p186 = scmp.eq.s32.totalorder %s26, 1
      %p187 = por %p185, %p186
      %p188 = scmp.ne.s32.totalorder %s177, %s178
      %p189 = scmp.eq.s32.totalorder %s26, 0
      %p190 = por %p188, %p189
      %p191 = scmp.ne.s32.totalorder %s177, %s178
      %p192 = scmp.eq.s32.totalorder %s27, 1
      %p193 = por %p191, %p192
      %p195 = scmp.ne.s32.totalorder %s178, %s194
      %p196 = scmp.eq.s32.totalorder %s27, 0
      %p197 = por %p195, %p196
      %s198 = ssub.s32 %s29, %s36
      %p199 = scmp.eq.s32.totalorder %s198, 0
      %s201 = sadd.s32 %s200, 1
      %s202 = scalar_select %p199, %s200, %s201
      %p205 = pneg %p199
      %p206 = scmp.eq.s32.totalorder %s21, 1
      %p207 = por %p205, %p206
      %p208 = scmp.ne.s32.totalorder %s200, %s203
      %p209 = scmp.eq.s32.totalorder %s21, 0
      %p210 = por %p208, %p209
      %p211 = scmp.ne.s32.totalorder %s200, %s203
      %p212 = scmp.eq.s32.totalorder %s26, 1
      %p213 = por %p211, %p212
      %p214 = scmp.ne.s32.totalorder %s203, %s204
      %p215 = scmp.eq.s32.totalorder %s26, 0
      %p216 = por %p214, %p215
      %p217 = scmp.ne.s32.totalorder %s203, %s204
      %p218 = scmp.eq.s32.totalorder %s27, 1
      %p219 = por %p217, %p218
      %p221 = scmp.ne.s32.totalorder %s204, %s220
      %p222 = scmp.eq.s32.totalorder %s27, 0
      %p223 = por %p221, %p222
      %s224 = ssub.s32 %s29, %s36
      %p225 = scmp.eq.s32.totalorder %s224, 0
      %s227 = sadd.s32 %s226, 1
      %s228 = scalar_select %p225, %s226, %s227
      %p231 = pneg %p225
      %p232 = scmp.eq.s32.totalorder %s21, 1
      %p233 = por %p231, %p232
      %p234 = scmp.ne.s32.totalorder %s226, %s229
      %p235 = scmp.eq.s32.totalorder %s21, 0
      %p236 = por %p234, %p235
      %p237 = scmp.ne.s32.totalorder %s226, %s229
      %p238 = scmp.eq.s32.totalorder %s26, 1
      %p239 = por %p237, %p238
      %p240 = scmp.ne.s32.totalorder %s229, %s230
      %p241 = scmp.eq.s32.totalorder %s26, 0
      %p242 = por %p240, %p241
      %p243 = scmp.ne.s32.totalorder %s229, %s230
      %p244 = scmp.eq.s32.totalorder %s27, 1
      %p245 = por %p243, %p244
      %p247 = scmp.ne.s32.totalorder %s230, %s246
      %p248 = scmp.eq.s32.totalorder %s27, 0
      %p249 = por %p247, %p248
      %s251 = sadd.s32 %s250, 1
      %p254 = scmp.eq.s32.totalorder %s21, 1
      %p255 = scmp.ne.s32.totalorder %s250, %s252
      %p256 = scmp.eq.s32.totalorder %s21, 0
      %p257 = por %p255, %p256
      %p258 = scmp.ne.s32.totalorder %s250, %s252
      %p259 = scmp.eq.s32.totalorder %s26, 1
      %p260 = por %p258, %p259
      %p261 = scmp.ne.s32.totalorder %s252, %s253
      %p262 = scmp.eq.s32.totalorder %s26, 0
      %p263 = por %p261, %p262
      %p264 = scmp.ne.s32.totalorder %s252, %s253
      %p265 = scmp.eq.s32.totalorder %s27, 1
      %p266 = por %p264, %p265
      %p268 = scmp.ne.s32.totalorder %s253, %s267
      %p269 = scmp.eq.s32.totalorder %s27, 0
      %p270 = por %p268, %p269
      %s271 = ssub.s32 %s28, %s40
      %p272 = scmp.eq.s32.totalorder %s271, 0
      %s274 = sadd.s32 %s273, 1
      %s275 = scalar_select %p272, %s273, %s274
      %p278 = pneg %p272
      %p279 = scmp.eq.s32.totalorder %s21, 1
      %p280 = por %p278, %p279
      %p281 = scmp.ne.s32.totalorder %s273, %s276
      %p282 = scmp.eq.s32.totalorder %s21, 0
      %p283 = por %p281, %p282
      %p284 = scmp.ne.s32.totalorder %s273, %s276
      %p285 = scmp.eq.s32.totalorder %s26, 1
      %p286 = por %p284, %p285
      %p287 = scmp.ne.s32.totalorder %s276, %s277
      %p288 = scmp.eq.s32.totalorder %s26, 0
      %p289 = por %p287, %p288
      %p290 = scmp.ne.s32.totalorder %s276, %s277
      %p291 = scmp.eq.s32.totalorder %s27, 1
      %p292 = por %p290, %p291
      %p294 = scmp.ne.s32.totalorder %s277, %s293
      %p295 = scmp.eq.s32.totalorder %s27, 0
      %p296 = por %p294, %p295
      %p297 = scmp.le.s32.totalorder 1, %s21
      %p298 = scmp.lt.s32.totalorder %s21, 3
      %p299 = pnand %p297, %p298
      %p300 = pneg %p299
      // Predicated region
      $region9: #{tpu_custom_call.1} parent=5 // pred_check
        _
      $region10: #{tpu_custom_call.1} parent=5 // pred_check_branch
        %302 = sbr.rel (%p299) target = $region12
      $region11: #{tpu_custom_call.1} parent=5 // pred_region
        %s303 = ssub.s32 %s21, 1
        // Predicated region
        $region13: #{tpu_custom_call.1} parent=11 // pred_check
          %p304 = pneg %p80
        $region14: #{tpu_custom_call.1} parent=11 // pred_check_branch
          %306 = sbr.rel (%p304) target = $region16
        $region15: #{tpu_custom_call.1} parent=11 // pred_region
          %308 = vsyncadd [#allocation5], 0
          %s310 = sshll.u32 %s1, 4
          %s311 = int_to_ptr.hbm [resolvable:$true] %s310
          %s312 = sshll.u32 [#allocation4], 4
          %s313 = int_to_ptr.vmem [resolvable:$true] %s312
          %315 = dma.hbm_to_vmem [thread:$0]  %s311, 64, %s313, [#allocation5]
        $region16: #{tpu_custom_call.1} parent=11 // pred_fallthru
          _
        // Predicated region
        $region17: #{tpu_custom_call.1} parent=11 // pred_check
          %p316 = pneg %p101
        $region18: #{tpu_custom_call.1} parent=11 // pred_check_branch
          %318 = sbr.rel (%p316) target = $region20
        $region19: #{tpu_custom_call.1} parent=11 // pred_region
          _
        $region20: #{tpu_custom_call.1} parent=11 // pred_fallthru
          _
        // Predicated region
        $region21: #{tpu_custom_call.1} parent=11 // pred_check
          %p319 = pneg %p122
        $region22: #{tpu_custom_call.1} parent=11 // pred_check_branch
          %321 = sbr.rel (%p319) target = $region24
        $region23: #{tpu_custom_call.1} parent=11 // pred_region
          _
        $region24: #{tpu_custom_call.1} parent=11 // pred_fallthru
          _
        // Predicated region
        $region25: #{tpu_custom_call.1} parent=11 // pred_check
          %p322 = pneg %p143
        $region26: #{tpu_custom_call.1} parent=11 // pred_check_branch
          %324 = sbr.rel (%p322) target = $region28
        $region27: #{tpu_custom_call.1} parent=11 // pred_region
          _
        $region28: #{tpu_custom_call.1} parent=11 // pred_fallthru
          _
        // Predicated region
        $region29: #{tpu_custom_call.1} parent=11 // pred_check
          %p325 = pneg %p164
        $region30: #{tpu_custom_call.1} parent=11 // pred_check_branch
          %327 = sbr.rel (%p325) target = $region32
        $region31: #{tpu_custom_call.1} parent=11 // pred_region
          _
        $region32: #{tpu_custom_call.1} parent=11 // pred_fallthru
          _
        // Predicated region
        $region33: #{tpu_custom_call.1} parent=11 // pred_check
          %p328 = pneg %p190
        $region34: #{tpu_custom_call.1} parent=11 // pred_check_branch
          %330 = sbr.rel (%p328) target = $region36
        $region35: #{tpu_custom_call.1} parent=11 // pred_region
          %332 = vsyncadd [#allocation8], 0
          %s333 = smul.addr %s31, 4
          %s334 = scalar_lea.hbm %s6, %s333
          %s335 = sshll.u32 %s334, 4
          %s336 = int_to_ptr.hbm [resolvable:$true] %s335
          %s337 = sshll.u32 [#allocation7], 4
          %s338 = int_to_ptr.vmem [resolvable:$true] %s337
          %343 = dma.hbm_to_vmem [thread:$0]  %s336, 256, %s338, [#allocation8], 64, 64, 4
        $region36: #{tpu_custom_call.1} parent=11 // pred_fallthru
          _
        // Predicated region
        $region37: #{tpu_custom_call.1} parent=11 // pred_check
          %p344 = pneg %p216
        $region38: #{tpu_custom_call.1} parent=11 // pred_check_branch
          %346 = sbr.rel (%p344) target = $region40
        $region39: #{tpu_custom_call.1} parent=11 // pred_region
          %p347 = scmp.lt.s32.totalorder %s31, 0
          %s348 = scalar_select %p347, %s31, 0
          %s349 = scalar_lea.vmem %s7, %s348
        $region40: #{tpu_custom_call.1} parent=11 // pred_fallthru
          _
        // Predicated region
        $region41: #{tpu_custom_call.1} parent=11 // pred_check
          %p350 = pneg %p242
        $region42: #{tpu_custom_call.1} parent=11 // pred_check_branch
          %352 = sbr.rel (%p350) target = $region44
        $region43: #{tpu_custom_call.1} parent=11 // pred_region
          %s353 = smul.u32 8, %s31
          %p354 = scmp.lt.s32.totalorder %s353, 7
          %s355 = scalar_select %p354, %s353, 7
          %s356 = smul.addr %s355, 4
          %s357 = scalar_lea.vmem %s8, %s356
          %s358 = smul.u32 8, %s31
        $region44: #{tpu_custom_call.1} parent=11 // pred_fallthru
          _
        // Predicated region
        $region45: #{tpu_custom_call.1} parent=11 // pred_check
          %p359 = pneg %p263
        $region46: #{tpu_custom_call.1} parent=11 // pred_check_branch
          %361 = sbr.rel (%p359) target = $region48
        $region47: #{tpu_custom_call.1} parent=11 // pred_region
          _
        $region48: #{tpu_custom_call.1} parent=11 // pred_fallthru
          _
      $region12: #{tpu_custom_call.1} parent=5 // pred_fallthru
        _
      %p362 = scmp.lt.s32.totalorder %s21, 2
      // Predicated region
      $region49: #{tpu_custom_call.1} parent=5 // pred_check
        %p363 = pneg %p362
      $region50: #{tpu_custom_call.1} parent=5 // pred_check_branch
        %365 = sbr.rel (%p363) target = $region52
      $region51: #{tpu_custom_call.1} parent=5 // pred_region
        // Predicated region
        $region53: #{tpu_custom_call.1} parent=51 // pred_check
          %p366 = pneg %p53
        $region54: #{tpu_custom_call.1} parent=51 // pred_check_branch
          %368 = sbr.rel (%p366) target = $region56
        $region55: #{tpu_custom_call.1} parent=51 // pred_region
          %p369 = scmp.lt.s32.totalorder %s28, 1
          %s370 = scalar_select %p369, %s28, 1
          %s371 = smul.addr %s370, 8
          %s372 = scalar_lea.vmem %s0, %s371
        $region56: #{tpu_custom_call.1} parent=51 // pred_fallthru
          _
      $region52: #{tpu_custom_call.1} parent=5 // pred_fallthru
        _
      %p373 = scmp.le.s32.totalorder 1, %s21
      %p374 = scmp.lt.s32.totalorder %s21, 3
      %p375 = pnand %p373, %p374
      %p376 = pneg %p375
      // Predicated region
      $region57: #{tpu_custom_call.1} parent=5 // pred_check
        _
      $region58: #{tpu_custom_call.1} parent=5 // pred_check_branch
        %378 = sbr.rel (%p375) target = $region60
      $region59: #{tpu_custom_call.1} parent=5 // pred_region
        %s379 = ssub.s32 %s21, 1
        // Predicated region
        $region61: #{tpu_custom_call.1} parent=59 // pred_check
          %p380 = pneg %p80
        $region62: #{tpu_custom_call.1} parent=59 // pred_check_branch
          %382 = sbr.rel (%p380) target = $region64
        $region63: #{tpu_custom_call.1} parent=59 // pred_region
          %384 = dma.done [#allocation5], 64
        $region64: #{tpu_custom_call.1} parent=59 // pred_fallthru
          _
        // Predicated region
        $region65: #{tpu_custom_call.1} parent=59 // pred_check
          %p385 = pneg %p190
        $region66: #{tpu_custom_call.1} parent=59 // pred_check_branch
          %387 = sbr.rel (%p385) target = $region68
        $region67: #{tpu_custom_call.1} parent=59 // pred_region
          %389 = dma.done [#allocation8], 256
        $region68: #{tpu_custom_call.1} parent=59 // pred_fallthru
          _
        %p390 = scmp.lt.s32.totalorder %s30, 1
        %s391 = scalar_select %p390, %s30, 1
        %s392 = smul.addr %s391, 8
        %s393 = scalar_lea.vmem %s0, %s392
        %p394 = pneg %p59
        %p395 = pneg %p56
        %p396 = pneg %p80
        %p397 = pneg %p77
        %p398 = pneg %p101
        %p399 = pneg %p98
        %p400 = pneg %p122
        %p401 = pneg %p119
        %p402 = pneg %p143
        %p403 = pneg %p140
        %p404 = pneg %p164
        %p405 = pneg %p161
        %p406 = pneg %p190
        %p407 = pneg %p187
        %p408 = scmp.lt.s32.totalorder %s31, 0
        %s409 = scalar_select %p408, %s31, 0
        %s410 = scalar_lea.vmem %s7, %s409
        %p411 = pneg %p216
        %p412 = pneg %p213
        %s413 = smul.u32 8, %s31
        %p414 = scmp.lt.s32.totalorder %s413, 7
        %s415 = scalar_select %p414, %s413, 7
        %s416 = smul.addr %s415, 4
        %s417 = scalar_lea.vmem %s8, %s416
        %p418 = pneg %p242
        %p419 = pneg %p239
        %p420 = pneg %p263
        %p421 = pneg %p260
        %p422 = pneg %p289
        %p423 = pneg %p286
        %s424 = sand.u32 %s276, 1
        %s425 = scalar_lea.sflag [#allocation6], %s424
        %s426 = sand.u32 %s276, 1
        %s427 = smul.addr %s426, 8
        %s428 = scalar_lea.vmem [#allocation9], %s427
        %p429 = scmp.lt.s32.totalorder %s30, 1
        %s430 = scalar_select %p429, %s30, 1
        %s431 = smul.addr %s430, 8
        %s432 = scalar_lea.vmem %s0, %s431
        %p433 = scmp.lt.s32.totalorder %s31, 0
        %s434 = scalar_select %p433, %s31, 0
        %s435 = scalar_lea.vmem %s7, %s434
        %s436 = smul.u32 8, %s31
        %p437 = scmp.lt.s32.totalorder %s436, 7
        %s438 = scalar_select %p437, %s436, 7
        %s439 = smul.addr %s438, 4
        %s440 = scalar_lea.vmem %s8, %s439
        %s441 = smul.u32 8, %s31
        %p443 = scmp.eq.s32.totalorder %s31, 0
        // Predicated region
        $region69: #{tpu_custom_call.1} parent=59 // pred_check
          %p444 = pneg %p443
        $region70: #{tpu_custom_call.1} parent=59 // pred_check_branch
          %446 = sbr.rel (%p444) target = $region72
        $region71: #{tpu_custom_call.1} parent=59 // pred_region
          %v447 = vld [vmem:[%s432] sm:$0xff]
          %v448 = vpack.c.bf16 %v447, %v447
          %v449 = vld [vmem:[%s2] sm:$0xf]
          %v450 = vld [vmem:[%s2 + $0x4] sm:$0xf]
          %v451 = vld [vmem:[%s2 + $0x8] sm:$0xf]
          %v452 = vld [vmem:[%s2 + $0xc] sm:$0xf]
          %v453 = vld [vmem:[%s3] sm:$0x1]
          %v455 = vperm.slane %v453, 0
          %v461 = vunpack.c.l.b16 %v449
          %v462 = vunpack.c.l.b16 %v450
          %v463 = vunpack.c.l.b16 %v451
          %v464 = vunpack.c.l.b16 %v452
          %v465 = vpack.c.b16 %v462, %v461
          %v466 = vpack.c.b16 %v464, %v463
          %vm469 = vcmask 261120
          %v471 = vsel %vm469, %v448, 0
          %473 = vmatpush.bf16.msra.mxu0 0
          %474 = vmatpush.bf16.msra.mxu0 0
          %475 = vmatpush.bf16.msra.mxu0 0
          %476 = vmatpush.bf16.msra.mxu0 0
          %477 = vmatpush.bf16.msra.mxu0 0
          %478 = vmatpush.bf16.msra.mxu0 0
          %479 = vmatpush.bf16.msra.mxu0 %v466
          %480 = vmatpush.bf16.msra.mxu0 %v465
          %481 = vmatmul.bf16.gmra.mxu0 %v471
          %v482 = vpop.f32.mrf.mxu0
          %v483 = vadd.f32 %v455, %v482
          %v484 = vpop.f32.mrf.mxu0
          %485 = vdwg.mxu0
          %487 = vrot.lane.b32.xlu0 %v483, 120
          %v488 = vpop.permute.xlu0 %487
          %490 = vrot.lane.b32.xlu0 %v483, 112
          %v491 = vpop.permute.xlu0 %490
          %493 = vrot.lane.b32.xlu0 %v483, 104
          %v494 = vpop.permute.xlu0 %493
          %v496 = vpack.c.bf16 %v483, %v483
          %v497 = vpack.c.bf16 %v488, %v488
          %v498 = vpack.c.bf16 %v491, %v491
          %v499 = vpack.c.bf16 %v494, %v494
          %v500 = vld [vmem:[#allocation4] sm:$0xf]
          %v501 = vunpack.c.l.bf16 %v500
          %v503 = vunpack.c.l.b16 %v496
          %v504 = vpack.c.b16 %v503, %v503
          %505 = vrot.lane.b32.xlu0 %v504, 96
          %v506 = vpop.permute.xlu0 %505
          %vm507 = vcmask 64512
          %v509 = vsel %vm507, %v496, 0
          %v512 = vsel %vm507, %v506, 0
          %514 = vmatpush.bf16.xpose.msra.mxu0 0
          %515 = vmatpush.bf16.xpose.msra.mxu0 0
          %516 = vmatpush.bf16.xpose.msra.mxu0 0
          %517 = vmatpush.bf16.xpose.msra.mxu0 0
          %518 = vmatpush.bf16.xpose.msra.mxu0 0
          %519 = vmatpush.bf16.xpose.msra.mxu0 0
          %520 = vmatpush.bf16.xpose.msra.mxu0 0
          %521 = vmatpush.bf16.xpose.msra.mxu0 %v512
          %522 = vmatmul.bf16.gmra.mxu0 %v509
          %v523 = vpop.f32.mrf.mxu0
          %v524 = vadd.f32 %v501, %v523
          %v525 = vpop.f32.mrf.mxu0
          %526 = vdwg.mxu0
          %v528 = vunpack.c.l.b16 %v497
          %v529 = vpack.c.b16 %v528, %v528
          %530 = vrot.lane.b32.xlu0 %v529, 96
          %v531 = vpop.permute.xlu0 %530
          %v533 = vsel %vm507, %v497, 0
          %v536 = vsel %vm507, %v531, 0
          %538 = vmatpush.bf16.xpose.msra.mxu0 0
          %539 = vmatpush.bf16.xpose.msra.mxu0 0
          %540 = vmatpush.bf16.xpose.msra.mxu0 0
          %541 = vmatpush.bf16.xpose.msra.mxu0 0
          %542 = vmatpush.bf16.xpose.msra.mxu0 0
          %543 = vmatpush.bf16.xpose.msra.mxu0 0
          %544 = vmatpush.bf16.xpose.msra.mxu0 0
          %545 = vmatpush.bf16.xpose.msra.mxu0 %v536
          %546 = vmatmul.bf16.gmra.mxu0 %v533
          %v547 = vpop.f32.mrf.mxu0
          %v548 = vadd.f32 %v501, %v547
          %v549 = vpop.f32.mrf.mxu0
          %550 = vdwg.mxu0
          %v552 = vunpack.c.l.b16 %v498
          %v553 = vpack.c.b16 %v552, %v552
          %554 = vrot.lane.b32.xlu0 %v553, 96
          %v555 = vpop.permute.xlu0 %554
          %v557 = vsel %vm507, %v498, 0
          %v560 = vsel %vm507, %v555, 0
          %562 = vmatpush.bf16.xpose.msra.mxu0 0
          %563 = vmatpush.bf16.xpose.msra.mxu0 0
          %564 = vmatpush.bf16.xpose.msra.mxu0 0
          %565 = vmatpush.bf16.xpose.msra.mxu0 0
          %566 = vmatpush.bf16.xpose.msra.mxu0 0
          %567 = vmatpush.bf16.xpose.msra.mxu0 0
          %568 = vmatpush.bf16.xpose.msra.mxu0 0
          %569 = vmatpush.bf16.xpose.msra.mxu0 %v560
          %570 = vmatmul.bf16.gmra.mxu0 %v557
          %v571 = vpop.f32.mrf.mxu0
          %v572 = vadd.f32 %v501, %v571
          %v573 = vpop.f32.mrf.mxu0
          %574 = vdwg.mxu0
          %v576 = vunpack.c.l.b16 %v499
          %v577 = vpack.c.b16 %v576, %v576
          %578 = vrot.lane.b32.xlu0 %v577, 96
          %v579 = vpop.permute.xlu0 %578
          %v581 = vsel %vm507, %v499, 0
          %v584 = vsel %vm507, %v579, 0
          %586 = vmatpush.bf16.xpose.msra.mxu0 0
          %587 = vmatpush.bf16.xpose.msra.mxu0 0
          %588 = vmatpush.bf16.xpose.msra.mxu0 0
          %589 = vmatpush.bf16.xpose.msra.mxu0 0
          %590 = vmatpush.bf16.xpose.msra.mxu0 0
          %591 = vmatpush.bf16.xpose.msra.mxu0 0
          %592 = vmatpush.bf16.xpose.msra.mxu0 0
          %593 = vmatpush.bf16.xpose.msra.mxu0 %v584
          %594 = vmatmul.bf16.gmra.mxu0 %v581
          %v595 = vpop.f32.mrf.mxu0
          %v596 = vadd.f32 %v501, %v595
          %v597 = vpop.f32.mrf.mxu0
          %598 = vdwg.mxu0
          %v599 = vsel %vm507, %v524, -inf
          %600 = vmax.xlane.f32.xlu0 %v599
          %v601 = vpop.xlane.xlu0 %600
          %v602 = vsel %vm507, %v548, -inf
          %603 = vmax.xlane.f32.xlu0 %v602
          %v604 = vpop.xlane.xlu0 %603
          %v605 = vsel %vm507, %v572, -inf
          %606 = vmax.xlane.f32.xlu0 %v605
          %v607 = vpop.xlane.xlu0 %606
          %v608 = vsel %vm507, %v596, -inf
          %609 = vmax.xlane.f32.xlu0 %v608
          %v610 = vpop.xlane.xlu0 %609
          %v611 = vsub.f32 %v524, %v601
          %v612 = vsub.f32 %v548, %v604
          %v613 = vsub.f32 %v572, %v607
          %v614 = vsub.f32 %v596, %v610
          %v615 = vmul.f32 %v611, 1.442695
          %v616 = vpow.pop %v615
          %v617 = vmul.f32 %v612, 1.442695
          %v618 = vpow.pop %v617
          %v619 = vmul.f32 %v613, 1.442695
          %v620 = vpow.pop %v619
          %v621 = vmul.f32 %v614, 1.442695
          %v622 = vpow.pop %v621
          %v623 = vsel %vm507, %v616, 0.0
          %624 = vadd.xlane.f32.xlu0 %v623
          %v625 = vpop.xlane.xlu0 %624
          %v626 = vsel %vm507, %v618, 0.0
          %627 = vadd.xlane.f32.xlu0 %v626
          %v628 = vpop.xlane.xlu0 %627
          %v629 = vsel %vm507, %v620, 0.0
          %630 = vadd.xlane.f32.xlu0 %v629
          %v631 = vpop.xlane.xlu0 %630
          %v632 = vsel %vm507, %v622, 0.0
          %633 = vadd.xlane.f32.xlu0 %v632
          %v634 = vpop.xlane.xlu0 %633
          %v635 = vrcp.pop %v625
          %v636 = vrcp.pop %v628
          %v637 = vrcp.pop %v631
          %v638 = vrcp.pop %v634
          %v639 = vmul.f32 %v616, %v635
          %v640 = vmul.f32 %v618, %v636
          %v641 = vmul.f32 %v620, %v637
          %v642 = vmul.f32 %v622, %v638
          %v643 = vpack.c.bf16 %v639, %v639
          %v644 = vpack.c.bf16 %v640, %v640
          %v645 = vpack.c.bf16 %v641, %v641
          %v646 = vpack.c.bf16 %v642, %v642
          %647 = vrot.lane.b32.xlu0 %v504, 64
          %v648 = vpop.permute.xlu0 %647
          %v650 = vsel %vm507, %v643, 0
          %vm652 = vcmask 1043456
          %v654 = vsel %vm652, %v648, 0
          %656 = vmatpush.bf16.msra.mxu0 0
          %657 = vmatpush.bf16.msra.mxu0 0
          %658 = vmatpush.bf16.msra.mxu0 0
          %659 = vmatpush.bf16.msra.mxu0 0
          %660 = vmatpush.bf16.msra.mxu0 0
          %661 = vmatpush.bf16.msra.mxu0 0
          %662 = vmatpush.bf16.msra.mxu0 0
          %663 = vmatpush.bf16.msra.mxu0 %v654
          %664 = vmatmul.bf16.gmra.mxu0 %v650
          %v665 = vpop.f32.mrf.mxu0
          %v666 = vadd.f32 0.0, %v665
          %v667 = vpop.f32.mrf.mxu0
          %668 = vdwg.mxu0
          %669 = vrot.lane.b32.xlu0 %v529, 64
          %v670 = vpop.permute.xlu0 %669
          %v672 = vsel %vm507, %v644, 0
          %v675 = vsel %vm652, %v670, 0
          %677 = vmatpush.bf16.msra.mxu0 0
          %678 = vmatpush.bf16.msra.mxu0 0
          %679 = vmatpush.bf16.msra.mxu0 0
          %680 = vmatpush.bf16.msra.mxu0 0
          %681 = vmatpush.bf16.msra.mxu0 0
          %682 = vmatpush.bf16.msra.mxu0 0
          %683 = vmatpush.bf16.msra.mxu0 0
          %684 = vmatpush.bf16.msra.mxu0 %v675
          %685 = vmatmul.bf16.gmra.mxu0 %v672
          %v686 = vpop.f32.mrf.mxu0
          %v687 = vadd.f32 0.0, %v686
          %v688 = vpop.f32.mrf.mxu0
          %689 = vdwg.mxu0
          %690 = vrot.lane.b32.xlu0 %v553, 64
          %v691 = vpop.permute.xlu0 %690
          %v693 = vsel %vm507, %v645, 0
          %v696 = vsel %vm652, %v691, 0
          %698 = vmatpush.bf16.msra.mxu0 0
          %699 = vmatpush.bf16.msra.mxu0 0
          %700 = vmatpush.bf16.msra.mxu0 0
          %701 = vmatpush.bf16.msra.mxu0 0
          %702 = vmatpush.bf16.msra.mxu0 0
          %703 = vmatpush.bf16.msra.mxu0 0
          %704 = vmatpush.bf16.msra.mxu0 0
          %705 = vmatpush.bf16.msra.mxu0 %v696
          %706 = vmatmul.bf16.gmra.mxu0 %v693
          %v707 = vpop.f32.mrf.mxu0
          %v708 = vadd.f32 0.0, %v707
          %v709 = vpop.f32.mrf.mxu0
          %710 = vdwg.mxu0
          %711 = vrot.lane.b32.xlu0 %v577, 64
          %v712 = vpop.permute.xlu0 %711
          %v714 = vsel %vm507, %v646, 0
          %v717 = vsel %vm652, %v712, 0
          %719 = vmatpush.bf16.msra.mxu0 0
          %720 = vmatpush.bf16.msra.mxu0 0
          %721 = vmatpush.bf16.msra.mxu0 0
          %722 = vmatpush.bf16.msra.mxu0 0
          %723 = vmatpush.bf16.msra.mxu0 0
          %724 = vmatpush.bf16.msra.mxu0 0
          %725 = vmatpush.bf16.msra.mxu0 0
          %726 = vmatpush.bf16.msra.mxu0 %v717
          %727 = vmatmul.bf16.gmra.mxu0 %v714
          %v728 = vpop.f32.mrf.mxu0
          %v729 = vadd.f32 0.0, %v728
          %v730 = vpop.f32.mrf.mxu0
          %731 = vdwg.mxu0
          %733 = vrot.lane.b32.xlu0 %v687, 8
          %v734 = vpop.permute.xlu0 %733
          %737 = vrot.lane.b32.xlu0 %v708, 16
          %v738 = vpop.permute.xlu0 %737
          %741 = vrot.lane.b32.xlu0 %v729, 24
          %v742 = vpop.permute.xlu0 %741
          %v744 = vsel %vm507, %v666, %v734
          %vm745 = vcmask 130048
          %v746 = vsel %vm745, %v744, %v738
          %vm747 = vcmask 195584
          %v748 = vsel %vm747, %v746, %v742
          %v749 = vpack.c.bf16 %v748, %v748
          %v750 = vld [vmem:[%s4] sm:$0xf]
          %v751 = vld [vmem:[%s4 + $0x4] sm:$0xf]
          %v752 = vld [vmem:[%s4 + $0x8] sm:$0xf]
          %v753 = vld [vmem:[%s4 + $0xc] sm:$0xf]
          %v754 = vld [vmem:[%s5] sm:$0x1]
          %v756 = vperm.slane %v754, 0
          %v762 = vunpack.c.l.b16 %v750
          %v763 = vunpack.c.l.b16 %v751
          %v764 = vunpack.c.l.b16 %v752
          %v765 = vunpack.c.l.b16 %v753
          %v766 = vpack.c.b16 %v763, %v762
          %v767 = vpack.c.b16 %v765, %v764
          %v771 = vsel %vm469, %v749, 0
          %773 = vmatpush.bf16.msra.mxu0 0
          %774 = vmatpush.bf16.msra.mxu0 0
          %775 = vmatpush.bf16.msra.mxu0 0
          %776 = vmatpush.bf16.msra.mxu0 0
          %777 = vmatpush.bf16.msra.mxu0 0
          %778 = vmatpush.bf16.msra.mxu0 0
          %779 = vmatpush.bf16.msra.mxu0 %v767
          %780 = vmatpush.bf16.msra.mxu0 %v766
          %781 = vmatmul.bf16.gmra.mxu0 %v771
          %v782 = vpop.f32.mrf.mxu0
          %v783 = vadd.f32 %v756, %v782
          %v784 = vpop.f32.mrf.mxu0
          %785 = vdwg.mxu0
          %v786 = vadd.f32 %v447, %v783
          %v787 = vsel %vm469, %v786, 0.0
          %788 = vadd.xlane.f32.xlu0 %v787
          %v789 = vpop.xlane.xlu0 %788
          %v790 = vrcp.pop 32.0
          %v791 = vmul.f32 32.0, %v790
          %v792 = vsub.f32 1.0, %v791
          %v793 = vmul.f32 %v790, %v792
          %v794 = vadd.f32 %v790, %v793
          %vm795 = vweird.f32 %v790
          %v796 = vsel %vm795, %v790, %v794
          %v797 = vmul.f32 %v789, %v796
          %v798 = vsub.f32 %v786, %v797
          %v799 = vmul.f32 %v798, %v798
          %v800 = vsel %vm469, %v799, 0.0
          %801 = vadd.xlane.f32.xlu0 %v800
          %v802 = vpop.xlane.xlu0 %801
          %v803 = vmul.f32 %v802, %v796
          %v804 = vadd.f32 %v803, 1e-05
          %v805 = vrsqrt.pop %v804
          %v806 = vmul.f32 %v805, %v804
          %v807 = vmul.f32 %v806, %v805
          %v808 = vmul.f32 0.5, %v807
          %v809 = vsub.f32 1.5, %v808
          %v810 = vmul.f32 %v805, %v809
          %vm811 = vweird.f32 %v804
          %vm812 = vweird.f32 %v805
          %vm813 = vmor %vm811, %vm812
          %v814 = vsel %vm813, %v805, %v810
          %v815 = vmul.f32 %v798, %v814
          %816 = vst.msk [vmem:[#allocation2] sm:$0xff] %vm469, %v815
          %817 = vst.msk [vmem:[#allocation3] sm:$0xff] %vm469, 0.0
        $region72: #{tpu_custom_call.1} parent=59 // pred_fallthru
          _
        %v818 = vld [vmem:[#allocation2] sm:$0xff]
        %v819 = vpack.c.bf16 %v818, %v818
        %v820 = vld [vmem:[#allocation7] sm:$0xf]
        %v821 = vld [vmem:[#allocation7 + $0x4] sm:$0xf]
        %v822 = vld [vmem:[#allocation7 + $0x8] sm:$0xf]
        %v823 = vld [vmem:[#allocation7 + $0xc] sm:$0xf]
        %v824 = vld [vmem:[%s435] sm:$0x1]
        %v826 = vperm.slane %v824, 0
        %v832 = vunpack.c.l.b16 %v820
        %v833 = vunpack.c.l.b16 %v821
        %v834 = vunpack.c.l.b16 %v822
        %v835 = vunpack.c.l.b16 %v823
        %v836 = vpack.c.b16 %v833, %v832
        %v837 = vpack.c.b16 %v835, %v834
        %vm840 = vcmask 261120
        %v842 = vsel %vm840, %v819, 0
        %844 = vmatpush.bf16.msra.mxu0 0
        %845 = vmatpush.bf16.msra.mxu0 0
        %846 = vmatpush.bf16.msra.mxu0 0
        %847 = vmatpush.bf16.msra.mxu0 0
        %848 = vmatpush.bf16.msra.mxu0 0
        %849 = vmatpush.bf16.msra.mxu0 0
        %850 = vmatpush.bf16.msra.mxu0 %v837
        %851 = vmatpush.bf16.msra.mxu0 %v836
        %852 = vmatmul.bf16.gmra.mxu0 %v842
        %v853 = vpop.f32.mrf.mxu0
        %v854 = vadd.f32 %v826, %v853
        %v855 = vpop.f32.mrf.mxu0
        %856 = vdwg.mxu0
        %v857 = vmax.f32 %v854, 0.0
        %v858 = vld [vmem:[#allocation3] sm:$0xff]
        %v859 = vpack.c.bf16 %v857, %v857
        %v860 = vld [vmem:[%s440] sm:$0xf]
        %v861 = vld [vmem:[%s440 + $0x4] sm:$0xf]
        %v862 = vld [vmem:[%s440 + $0x8] sm:$0xf]
        %v863 = vld [vmem:[%s440 + $0xc] sm:$0xf]
        %v864 = vld [vmem:[%s440 + $0x10] sm:$0xf]
        %v865 = vld [vmem:[%s440 + $0x14] sm:$0xf]
        %v866 = vld [vmem:[%s440 + $0x18] sm:$0xf]
        %v867 = vld [vmem:[%s440 + $0x1c] sm:$0xf]
        %v876 = vunpack.c.l.b16 %v860
        %v877 = vunpack.c.l.b16 %v861
        %v878 = vunpack.c.l.b16 %v862
        %v879 = vunpack.c.l.b16 %v863
        %v880 = vunpack.c.l.b16 %v864
        %v881 = vunpack.c.l.b16 %v865
        %v882 = vunpack.c.l.b16 %v866
        %v883 = vunpack.c.l.b16 %v867
        %v884 = vpack.c.b16 %v877, %v876
        %v885 = vpack.c.b16 %v879, %v878
        %v886 = vpack.c.b16 %v881, %v880
        %v887 = vpack.c.b16 %v883, %v882
        %vm892 = vcmask 523264
        %v894 = vsel %vm892, %v859, 0
        %896 = vmatpush.bf16.msra.mxu0 0
        %897 = vmatpush.bf16.msra.mxu0 0
        %898 = vmatpush.bf16.msra.mxu0 0
        %899 = vmatpush.bf16.msra.mxu0 0
        %900 = vmatpush.bf16.msra.mxu0 %v887
        %901 = vmatpush.bf16.msra.mxu0 %v886
        %902 = vmatpush.bf16.msra.mxu0 %v885
        %903 = vmatpush.bf16.msra.mxu0 %v884
        %904 = vmatmul.bf16.gmra.mxu0 %v894
        %v905 = vpop.f32.mrf.mxu0
        %v906 = vadd.f32 0.0, %v905
        %v907 = vpop.f32.mrf.mxu0
        %908 = vdwg.mxu0
        %v909 = vadd.f32 %v858, %v906
        %910 = vst.msk [vmem:[#allocation3] sm:$0xff] %vm840, %v909
        // Predicated region
        $region73: #{tpu_custom_call.1} parent=59 // pred_check
          %p911 = pneg %p443
        $region74: #{tpu_custom_call.1} parent=59 // pred_check_branch
          %913 = sbr.rel (%p911) target = $region76
        $region75: #{tpu_custom_call.1} parent=59 // pred_region
          %v914 = vld [vmem:[#allocation3] sm:$0xff]
          %v915 = vld [vmem:[%s9] sm:$0x1]
          %v917 = vperm.slane %v915, 0
          %v919 = vadd.f32 %v914, %v917
          %v920 = vld [vmem:[#allocation2] sm:$0xff]
          %v921 = vadd.f32 %v920, %v919
          %v922 = vsel %vm840, %v921, 0.0
          %923 = vadd.xlane.f32.xlu0 %v922
          %v924 = vpop.xlane.xlu0 %923
          %v925 = vrcp.pop 32.0
          %v926 = vmul.f32 32.0, %v925
          %v927 = vsub.f32 1.0, %v926
          %v928 = vmul.f32 %v925, %v927
          %v929 = vadd.f32 %v925, %v928
          %vm930 = vweird.f32 %v925
          %v931 = vsel %vm930, %v925, %v929
          %v932 = vmul.f32 %v924, %v931
          %v933 = vsub.f32 %v921, %v932
          %v934 = vmul.f32 %v933, %v933
          %v935 = vsel %vm840, %v934, 0.0
          %936 = vadd.xlane.f32.xlu0 %v935
          %v937 = vpop.xlane.xlu0 %936
          %v938 = vmul.f32 %v937, %v931
          %v939 = vadd.f32 %v938, 1e-05
          %v940 = vrsqrt.pop %v939
          %v941 = vmul.f32 %v940, %v939
          %v942 = vmul.f32 %v941, %v940
          %v943 = vmul.f32 0.5, %v942
          %v944 = vsub.f32 1.5, %v943
          %v945 = vmul.f32 %v940, %v944
          %vm946 = vweird.f32 %v939
          %vm947 = vweird.f32 %v940
          %vm948 = vmor %vm946, %vm947
          %v949 = vsel %vm948, %v940, %v945
          %v950 = vmul.f32 %v933, %v949
          %951 = vst.msk [vmem:[%s428] sm:$0xff] %vm840, %v950
        $region76: #{tpu_custom_call.1} parent=59 // pred_fallthru
          _
        %s952 = sand.u32 %s276, 1
        %s953 = scalar_lea.sflag [#allocation6], %s952
        %s954 = sand.u32 %s276, 1
        %s955 = smul.addr %s954, 8
        %s956 = scalar_lea.vmem [#allocation9], %s955
        // Predicated region
        $region77: #{tpu_custom_call.1} parent=59 // pred_check
          %p957 = pneg %p286
        $region78: #{tpu_custom_call.1} parent=59 // pred_check_branch
          %959 = sbr.rel (%p957) target = $region80
        $region79: #{tpu_custom_call.1} parent=59 // pred_region
          %961 = vsyncadd %s953, 0
          %s962 = smul.addr %s30, 8
          %s963 = scalar_lea.hbm %s10, %s962
          %s965 = sshll.u32 %s956, 4
          %s966 = int_to_ptr.vmem [resolvable:$true] %s965
          %s967 = sshll.u32 %s963, 4
          %s968 = int_to_ptr.hbm [resolvable:$true] %s967
          %970 = dma.vmem_to_hbm [thread:$0]  %s966, 128, %s968, %s953
        $region80: #{tpu_custom_call.1} parent=59 // pred_fallthru
          _
      $region60: #{tpu_custom_call.1} parent=5 // pred_fallthru
        _
      %p971 = scmp.le.s32.totalorder 2, %s21
      // Predicated region
      $region81: #{tpu_custom_call.1} parent=5 // pred_check
        %p972 = pneg %p971
      $region82: #{tpu_custom_call.1} parent=5 // pred_check_branch
        %974 = sbr.rel (%p972) target = $region84
      $region83: #{tpu_custom_call.1} parent=5 // pred_region
        %s975 = ssub.s32 %s21, 2
        // Predicated region
        $region85: #{tpu_custom_call.1} parent=83 // pred_check
          %p976 = pneg %p292
        $region86: #{tpu_custom_call.1} parent=83 // pred_check_branch
          %978 = sbr.rel (%p976) target = $region88
        $region87: #{tpu_custom_call.1} parent=83 // pred_region
          %s979 = sand.u32 %s277, 1
          %s980 = scalar_lea.sflag [#allocation6], %s979
          %s981 = sand.u32 %s277, 1
          %s982 = smul.addr %s981, 8
          %s983 = scalar_lea.vmem [#allocation9], %s982
          %985 = dma.done %s980, 128
        $region88: #{tpu_custom_call.1} parent=83 // pred_fallthru
          _
      $region84: #{tpu_custom_call.1} parent=5 // pred_fallthru
        _
    $region6: #{tpu_custom_call.1} parent=1 // loop_footer
      %s25 = sadd.s32 1, %s21
    $region7: #{tpu_custom_call.1} parent=1 // loop_footer_branch
      %20 = sbr.rel target = $region3
    $region8: #{tpu_custom_call.1} parent=1 // loop_exit
      _
    %986 = vsyncpa [#allocation5], 1
    %s987 = scalar_lea.sflag [#allocation5], 1
    %988 = vsyncpa %s987, 1
    %989 = vsyncpa [#allocation8], 1
    %990 = vsyncpa [#allocation6], 1
    %s991 = scalar_lea.sflag [#allocation6], 1
    %992 = vsyncpa %s991, 1

</llo_original>
